<compile_context>
chip_gen: v6e
topology: v6e:2x2x1
jax: 0.10.0
libtpu: 0.0.40
codegen_flags: <defaults>
</compile_context>

<pallas_src>
import functools

import jax
import jax.numpy as jnp
from jax.experimental import pallas as pl
from jax.experimental.pallas import tpu as pltpu

SPECIAL_TOKEN_MAX = 1  # token ids <= 1 are "special" (pad/eos) and skipped,
                       # mirroring skip_special_tokens=True in batch_decode


def qa_pred_kernel(params_ref, resp_ref, choice_ref, pred_ref, *,
                   field_bits, packed_reduce):
    # params_ref: SMEM [C]       int32; params[c] = idx[c]-idx[C-1] for c<C-1,
    #                                   params[C-1] = idx[C-1] (fallback index)
    # resp_ref:   VMEM [Leff,TB] int32 (token position on sublanes, batch on lanes)
    # choice_ref: VMEM [Leff,C]  int32 (pre-masked / pre-packed in the wrapper)
    # pred_ref:   VMEM [1, TB]   int32 (lane-dense output row)
    resp = resp_ref[...]          # [Leff, TB]
    choices = choice_ref[...]     # [Leff, C]
    tb = resp.shape[1]
    num_choices = choices.shape[1]

    default_idx = params_ref[num_choices - 1]
    acc = jnp.zeros((1, tb), dtype=jnp.int32)

    # At most one (masked) choice row matches a response, so matches are
    # accumulated arithmetically: pred = idx_last + sum_c match_c * delta_c.
    # The last choice is skipped because its delta is zero by construction.
    if packed_reduce and num_choices > 1:
        # Field-packed mismatch counts: one sublane reduce total (XLU) instead
        # of C-1; the per-choice work is cheap VPU compares/shifts/adds.
        bits = jnp.zeros(resp.shape, dtype=jnp.int32)
        for c in range(num_choices - 1):
            mism = (resp != choices[:, c:c + 1]).astype(jnp.int32)   # [Leff, TB]
            bits = bits + jnp.left_shift(mism, c * field_bits)
        counts = jnp.sum(bits, axis=0, keepdims=True)                # [1, TB]
        fmask = (1 << field_bits) - 1
        for c in range(num_choices - 1):
            field = jnp.bitwise_and(jnp.right_shift(counts, c * field_bits), fmask)
            acc = acc + (field == 0).astype(jnp.int32) * params_ref[c]
    else:
        # Fallback path (field bits would not fit in 31 bits): per-choice
        # boolean all-reduce, still no extra int32 temporaries.
        for c in range(num_choices - 1):
            match = jnp.all(resp == choices[:, c:c + 1], axis=0, keepdims=True)
            acc = acc + match.astype(jnp.int32) * params_ref[c]

    pred_ref[...] = default_idx + acc


def _round_down(x, m):
    return (x // m) * m


def _prep_tokens(x, pack):
    # skip_special_tokens analog: neutralize special ids before comparison.
    x = jnp.where(x <= SPECIAL_TOKEN_MAX, 0, x)
    if pack:
        # Pack two token positions into one int32 word (requires vocab < 65536):
        # halves HBM/VMEM traffic and the compare / reduce depth.
        if x.shape[1] % 2:
            x = jnp.pad(x, ((0, 0), (0, 1)))
        x = jnp.bitwise_or(x[:, 0::2], jnp.left_shift(x[:, 1::2], 16))
    return x


@functools.partial(jax.jit, static_argnames=("tile_b", "pack_pairs"))
def multiple_choice_qa_forward(qa_responses, choice_tokens, choice_idx, *,
                               tile_b=8192, pack_pairs=True):
    """Pallas equivalent of MultipleChoiceQAModule.forward's prediction path.

    Args:
      qa_responses:  [B, L] int32 response token ids.
      choice_tokens: [C, L] int32 tokenized choice strings.
      choice_idx:    [C]    int32 choice -> label index (choice_map values).
      pack_pairs:    pack two token positions per int32 word (vocab < 65536).

    Returns int32 prediction indices of shape [B] (torch.long in the original;
    int32 here since JAX x64 is off by default).
    """
    B, L = qa_responses.shape
    C, Lc = choice_tokens.shape
    assert L == Lc, (L, Lc)

    # --- layout plumbing: mask + pack fused (this wrapper is jitted, so the
    # mask/pack/pad/transpose below become one XLA pass over the responses). ---
    resp = _prep_tokens(jnp.asarray(qa_responses, jnp.int32), pack_pairs)   # [B, Leff]
    chs = _prep_tokens(jnp.asarray(choice_tokens, jnp.int32), pack_pairs)   # [C, Leff]
    Leff = resp.shape[1]

    # --- tile size from an explicit VMEM budget (includes Leff):
    # 2 double-buffered input blocks + ~3 in-kernel [Leff, tb] temporaries. ---
    vmem_budget = 12 << 20
    bytes_per_lane = 4 * Leff * 5 + 32
    tb = _round_down(max(128, vmem_budget // bytes_per_lane), 128)
    tb = min(tb, tile_b)
    tb = min(tb, ((B + 127) // 128) * 128)          # don't over-pad small batches
    quarter = _round_down(B // 4, 128)              # >=4 grid steps when batch allows
    if quarter >= 128:                              # (v7x megacore sharding)
        tb = min(tb, quarter)
    tb = max(128, tb)
    bp = ((B + tb - 1) // tb) * tb

    if bp != B:
        # zero padding masks to all-special rows -> fallback index; sliced off below
        resp = jnp.pad(resp, ((0, bp - B), (0, 0)))
    resp_t = resp.T                                  # [Leff, bp], batch on lanes
    chs_t = chs.T                                    # [Leff, C]

    # Per-choice deltas + fallback index, scalar-prefetched into SMEM.
    choice_idx = jnp.asarray(choice_idx, jnp.int32)
    params = jnp.concatenate([choice_idx[:-1] - choice_idx[-1], choice_idx[-1:]])

    # Field-packed reduce configuration (static).
    field_bits = max(1, int(Leff).bit_length())      # holds counts up to Leff
    packed_reduce = C >= 2 and (C - 1) * field_bits <= 31

    # VMEM limit with headroom (block is budget-derived, so this stays small).
    block_bytes = 4 * Leff * tb
    vmem_limit = int(min(64 << 20, max(8 << 20, 6 * block_bytes)))

    kernel = functools.partial(
        qa_pred_kernel, field_bits=field_bits, packed_reduce=packed_reduce)

    out = pl.pallas_call(
        kernel,
        out_shape=jax.ShapeDtypeStruct((1, bp), jnp.int32),
        grid_spec=pltpu.PrefetchScalarGridSpec(
            num_scalar_prefetch=1,                   # params -> SMEM
            grid=(bp // tb,),
            in_specs=[
                # responses stream, tiled over the batch (lane) axis
                pl.BlockSpec((Leff, tb), lambda i, p: (0, i)),
                # tiny choice table: constant index_map, stays resident
                pl.BlockSpec((Leff, C), lambda i, p: (0, 0)),
            ],
            out_specs=pl.BlockSpec((1, tb), lambda i, p: (0, i)),
        ),
        compiler_params=pltpu.CompilerParams(
            dimension_semantics=("parallel",),       # v7x: shard batch across 2 TCs
            vmem_limit_bytes=vmem_limit,
        ),
    )(params, resp_t, chs_t)
    return out[0, :B]


# TODO(synk): tokenizer.batch_decode, str.title(), and the qa_id "ex||q" string
# split that produces ex_ids are pure string/dict ops with no Pallas equivalent;
# they are replaced by deterministic synthetic token-id rows per choice below.
# NOTE: the positional masked-equality match assumes special tokens appear only
# as trailing padding and that masked choice rows are distinct and non-empty
# (matching the original module's behaviour for well-formed generations).
def _synthetic_tokenize(text, length):
    ids = [(ord(ch) % 97) + 2 for ch in text.lower() if ch.isalnum()][:length]
    ids = ids + [0] * (length - len(ids))  # pad with special id 0
    return ids


if __name__ == "__main__":
    key = jax.random.PRNGKey(0)

    B, L = 8, 8            # batch of responses, response/choice token length
    # Module config analog (deterministic, in-script):
    label_map = {"Agree": 0, "Disagree": 1, "Not Relevant": 2, "No Stance": 3}
    choice_map = {"Agree": 0, "Disagree": 1, "Not Relevant": 2, "No Stance": 3}
    choices = list(choice_map.keys())
    C = len(choices)

    choice_tokens = jnp.array(
        [_synthetic_tokenize(c, L) for c in choices], dtype=jnp.int32
    )  # [C, L]
    choice_idx = jnp.array([choice_map[c] for c in choices], dtype=jnp.int32)  # [C]

    # Build qa_responses: some rows "decode" to a known choice, others are
    # gibberish (which must fall back to the last choice's index).
    pick = jax.device_get(jax.random.randint(key, (B,), 0, C + 2))
    rows, expected = [], []
    choice_tokens_host = jax.device_get(choice_tokens)
    for b in range(B):
        if pick[b] < C:
            rows.append(list(choice_tokens_host[pick[b]]))
            expected.append(int(choice_map[choices[int(pick[b])]]))
        else:
            rows.append(_synthetic_tokenize("gibberish response", L))
            expected.append(int(choice_map[choices[-1]]))  # fallback
    qa_responses = jnp.array(rows, dtype=jnp.int32)  # [B, L]

    preds = multiple_choice_qa_forward(qa_responses, choice_tokens, choice_idx)
    preds = jax.block_until_ready(preds)

    assert preds.shape == (B,), preds.shape
    assert preds.dtype == jnp.int32, preds.dtype
    assert list(jax.device_get(preds)) == expected, (
        list(jax.device_get(preds)),
        expected,
    )
    print("KERNEL_OK")
</pallas_src>

<mosaic_0001>
module attributes {stable_mosaic.version = 11 : i64} {
  func.func @qa_pred_kernel(%arg0: i32, %arg1: memref<4xi32, #tpu.memory_space<smem>>, %arg2: memref<4x128xi32, #tpu.memory_space<vmem>>, %arg3: memref<4x4xi32, #tpu.memory_space<vmem>>, %arg4: memref<1x128xi32, #tpu.memory_space<vmem>>) attributes {dimension_semantics = [#tpu.dimension_semantics<parallel>], iteration_bounds = array<i64: 1>, scalar_prefetch = 1 : i64, scratch_operands = 0 : i64, tpu.core_type = #tpu.core_type<tc>, window_params = [{transform_indices = @transform_0, window_bounds = array<i64: 4, 128>}, {pipeline_mode = #tpu.pipeline_mode<synchronous>, transform_indices = @transform_1, window_bounds = array<i64: 4, 4>}, {transform_indices = @transform_2, window_bounds = array<i64: 1, 128>}]} {
    %c0 = arith.constant 0 : index
    %c0_0 = arith.constant 0 : index
    %0 = vector.load %arg2[%c0, %c0_0] : memref<4x128xi32, #tpu.memory_space<vmem>>, vector<4x128xi32>
    %c0_1 = arith.constant 0 : index
    %c0_2 = arith.constant 0 : index
    %1 = vector.load %arg3[%c0_1, %c0_2] : memref<4x4xi32, #tpu.memory_space<vmem>>, vector<4x4xi32>
    %c3 = arith.constant 3 : index
    %2 = memref.load %arg1[%c3] : memref<4xi32, #tpu.memory_space<smem>>
    %c0_i32 = arith.constant 0 : i32
    %3 = vector.broadcast %c0_i32 : i32 to vector<1x128xi32>
    %c0_i32_3 = arith.constant 0 : i32
    %4 = vector.broadcast %c0_i32_3 : i32 to vector<4x128xi32>
    %5 = vector.extract_strided_slice %1 {offsets = [0, 0], sizes = [4, 1], strides = [1, 1]} : vector<4x4xi32> to vector<4x1xi32>
    %6 = vector.broadcast %5 : vector<4x1xi32> to vector<4x128xi32>
    %7 = arith.cmpi ne, %0, %6 : vector<4x128xi32>
    %8 = arith.extui %7 : vector<4x128xi1> to vector<4x128xi32>
    %c0_i32_4 = arith.constant 0 : i32
    %9 = vector.broadcast %c0_i32_4 : i32 to vector<4x128xi32>
    %10 = arith.shli %8, %9 : vector<4x128xi32>
    %11 = arith.addi %4, %10 : vector<4x128xi32>
    %12 = vector.extract_strided_slice %1 {offsets = [0, 1], sizes = [4, 1], strides = [1, 1]} : vector<4x4xi32> to vector<4x1xi32>
    %13 = vector.broadcast %12 : vector<4x1xi32> to vector<4x128xi32>
    %14 = arith.cmpi ne, %0, %13 : vector<4x128xi32>
    %15 = arith.extui %14 : vector<4x128xi1> to vector<4x128xi32>
    %c3_i32 = arith.constant 3 : i32
    %16 = vector.broadcast %c3_i32 : i32 to vector<4x128xi32>
    %17 = arith.shli %15, %16 : vector<4x128xi32>
    %18 = arith.addi %11, %17 : vector<4x128xi32>
    %19 = vector.extract_strided_slice %1 {offsets = [0, 2], sizes = [4, 1], strides = [1, 1]} : vector<4x4xi32> to vector<4x1xi32>
    %20 = vector.broadcast %19 : vector<4x1xi32> to vector<4x128xi32>
    %21 = arith.cmpi ne, %0, %20 : vector<4x128xi32>
    %22 = arith.extui %21 : vector<4x128xi1> to vector<4x128xi32>
    %c6_i32 = arith.constant 6 : i32
    %23 = vector.broadcast %c6_i32 : i32 to vector<4x128xi32>
    %24 = arith.shli %22, %23 : vector<4x128xi32>
    %25 = arith.addi %18, %24 : vector<4x128xi32>
    %cst = arith.constant dense<0> : vector<128xi32>
    %26 = vector.multi_reduction <add>, %25, %cst [0] : vector<4x128xi32> to vector<128xi32>
    %27 = vector.shape_cast %26 : vector<128xi32> to vector<1x128xi32>
    %c0_i32_5 = arith.constant 0 : i32
    %28 = vector.broadcast %c0_i32_5 : i32 to vector<1x128xi32>
    %29 = arith.shrsi %27, %28 : vector<1x128xi32>
    %c7_i32 = arith.constant 7 : i32
    %30 = vector.broadcast %c7_i32 : i32 to vector<1x128xi32>
    %31 = arith.andi %29, %30 : vector<1x128xi32>
    %c0_i32_6 = arith.constant 0 : i32
    %32 = vector.broadcast %c0_i32_6 : i32 to vector<1x128xi32>
    %33 = arith.cmpi eq, %31, %32 : vector<1x128xi32>
    %34 = arith.extui %33 : vector<1x128xi1> to vector<1x128xi32>
    %c0_7 = arith.constant 0 : index
    %35 = memref.load %arg1[%c0_7] : memref<4xi32, #tpu.memory_space<smem>>
    %36 = vector.broadcast %35 : i32 to vector<1x128xi32>
    %37 = arith.muli %34, %36 : vector<1x128xi32>
    %38 = arith.addi %3, %37 : vector<1x128xi32>
    %c3_i32_8 = arith.constant 3 : i32
    %39 = vector.broadcast %c3_i32_8 : i32 to vector<1x128xi32>
    %40 = arith.shrsi %27, %39 : vector<1x128xi32>
    %c7_i32_9 = arith.constant 7 : i32
    %41 = vector.broadcast %c7_i32_9 : i32 to vector<1x128xi32>
    %42 = arith.andi %40, %41 : vector<1x128xi32>
    %c0_i32_10 = arith.constant 0 : i32
    %43 = vector.broadcast %c0_i32_10 : i32 to vector<1x128xi32>
    %44 = arith.cmpi eq, %42, %43 : vector<1x128xi32>
    %45 = arith.extui %44 : vector<1x128xi1> to vector<1x128xi32>
    %c1 = arith.constant 1 : index
    %46 = memref.load %arg1[%c1] : memref<4xi32, #tpu.memory_space<smem>>
    %47 = vector.broadcast %46 : i32 to vector<1x128xi32>
    %48 = arith.muli %45, %47 : vector<1x128xi32>
    %49 = arith.addi %38, %48 : vector<1x128xi32>
    %c6_i32_11 = arith.constant 6 : i32
    %50 = vector.broadcast %c6_i32_11 : i32 to vector<1x128xi32>
    %51 = arith.shrsi %27, %50 : vector<1x128xi32>
    %c7_i32_12 = arith.constant 7 : i32
    %52 = vector.broadcast %c7_i32_12 : i32 to vector<1x128xi32>
    %53 = arith.andi %51, %52 : vector<1x128xi32>
    %c0_i32_13 = arith.constant 0 : i32
    %54 = vector.broadcast %c0_i32_13 : i32 to vector<1x128xi32>
    %55 = arith.cmpi eq, %53, %54 : vector<1x128xi32>
    %56 = arith.extui %55 : vector<1x128xi1> to vector<1x128xi32>
    %c2 = arith.constant 2 : index
    %57 = memref.load %arg1[%c2] : memref<4xi32, #tpu.memory_space<smem>>
    %58 = vector.broadcast %57 : i32 to vector<1x128xi32>
    %59 = arith.muli %56, %58 : vector<1x128xi32>
    %60 = arith.addi %49, %59 : vector<1x128xi32>
    %61 = vector.broadcast %2 : i32 to vector<1x128xi32>
    %62 = arith.addi %61, %60 : vector<1x128xi32>
    %c0_14 = arith.constant 0 : index
    %c0_15 = arith.constant 0 : index
    %63 = vector.load %arg4[%c0_14, %c0_15] : memref<1x128xi32, #tpu.memory_space<vmem>>, vector<1x128xi32>
    tpu.vector_store %arg4[%c0_14, %c0_15], %62 {strides = array<i32>} : memref<1x128xi32, #tpu.memory_space<vmem>>, vector<1x128xi32>,
    return
  }
  func.func @transform_0(%arg0: i32, %arg1: memref<4xi32, #tpu.memory_space<smem>>) -> (i32, i32) {
    %c0_i32 = arith.constant 0 : i32
    %c0_i32_0 = arith.constant 0 : i32
    return %c0_i32, %arg0 : i32, i32
  }
  func.func @transform_1(%arg0: i32, %arg1: memref<4xi32, #tpu.memory_space<smem>>) -> (i32, i32) {
    %c0_i32 = arith.constant 0 : i32
    %c0_i32_0 = arith.constant 0 : i32
    %c0_i32_1 = arith.constant 0 : i32
    return %c0_i32, %c0_i32_0 : i32, i32
  }
  func.func @transform_2(%arg0: i32, %arg1: memref<4xi32, #tpu.memory_space<smem>>) -> (i32, i32) {
    %c0_i32 = arith.constant 0 : i32
    %c0_i32_0 = arith.constant 0 : i32
    return %c0_i32, %arg0 : i32, i32
  }
}

</mosaic_0001>

<llo_original>
// kernel: multiple_choice_qa_forward.1
$region0: #{multiple_choice_qa_forward.1}
  #allocation0 [shape = 'u32[]', space=smem, size = 0x4, offset = 0x4, fixed_abs, tag = 'smem constant byte address 0x4 - core index']
  #allocation1 [shape = 'u32[144,128]{1,0:T(1,128)}', space=vmem, size = 0x12000, scoped, tag = 'internal scratch']
  #allocation2 [shape = 's32[1]{0}', space=sflag, size = 0x4, scoped, tag = 'scoped memory for multiple_choice_qa_forward.1']
  #allocation3 [shape = 'u8[512]{0}', space=smem, size = 0x200, scoped, tag = 'prefetched SMEM operand 0']
  %s0 = inlined_call_operand.vmem [shape: s32[4], index: 0, kind: input, shape index: {}]
  %s1 = inlined_call_operand.vmem [shape: s32[4,128], index: 1, kind: input, shape index: {}]
  %s2 = inlined_call_operand.vmem [shape: s32[4,4], index: 2, kind: input, shape index: {}]
  %s3 = inlined_call_operand.vmem [shape: s32[1,128], index: 3, kind: output, shape index: {}]
  %s4 = sld [smem:[#allocation0]]
  $region18: #{multiple_choice_qa_forward.1} parent=0
    _
  %s6 = ssub.s32 1, %s4
  %s7 = scalar_select 0, %s6, %s4
  %s8 = sshll.u32 %s0, 4
  %s9 = int_to_ptr.vmem [resolvable:$true] %s8
  %11 = dma.vmem_to_smem %s9, 16, [#allocation3], [#allocation2]
  %12 = dma.done [#allocation2], 16
  %13 = sfence
  // Predicated region
  $region2: #{multiple_choice_qa_forward.1} parent=0 // pred_check
    _
  $region3: #{multiple_choice_qa_forward.1} parent=0 // pred_check_branch
    %15 = sbr.rel (0) target = $region5
  $region4: #{multiple_choice_qa_forward.1} parent=0 // pred_region
    _
  $region5: #{multiple_choice_qa_forward.1} parent=0 // pred_fallthru
    _
  // Predicated region
  $region6: #{multiple_choice_qa_forward.1} parent=0 // pred_check
    _
  $region7: #{multiple_choice_qa_forward.1} parent=0 // pred_check_branch
    %17 = sbr.rel (0) target = $region9
  $region8: #{multiple_choice_qa_forward.1} parent=0 // pred_region
    _
  $region9: #{multiple_choice_qa_forward.1} parent=0 // pred_fallthru
    _
  %v18 = vld [vmem:[%s1] sm:$0xf]
  %v19 = vld [vmem:[%s2] sm:$0xf]
  %s20 = sld [smem:[#allocation3 + $0x3]]
  %21 = vset.pattern.permute.xlu0 0
  %22 = vperm.xlu0 %21, %v19
  %v23 = vpop.permute.xlu0 %22
  %vm24 = vcmp.ne.s32.totalorder %v18, %v23
  %v25 = vsel %vm24, 1, 0
  %26 = vset.pattern.permute.xlu0 1
  %27 = vperm.xlu0 %26, %v19
  %v28 = vpop.permute.xlu0 %27
  %vm29 = vcmp.ne.s32.totalorder %v18, %v28
  %v30 = vsel %vm29, 1, 0
  %v31 = vshll.u32 %v30, 3
  %v32 = vadd.s32 %v25, %v31
  %33 = vset.pattern.permute.xlu0 2
  %34 = vperm.xlu0 %33, %v19
  %v35 = vpop.permute.xlu0 %34
  %vm36 = vcmp.ne.s32.totalorder %v18, %v35
  %v37 = vsel %vm36, 1, 0
  %v38 = vshll.u32 %v37, 6
  %v39 = vadd.s32 %v32, %v38
  %vm40 = vcmask 1043456
  %v41 = vsel %vm40, %v39, 0
  %v42 = vrot.slane %v41, 4
  %v43 = vadd.s32 %v41, %v42
  %v44 = vrot.slane %v43, 2
  %v45 = vadd.s32 %v43, %v44
  %v46 = vrot.slane %v45, 1
  %v47 = vadd.s32 %v45, %v46
  %v48 = vand.u32 %v47, 7
  %vm49 = vcmp.eq.s32.totalorder %v48, 0
  %v50 = vsel %vm49, 1, 0
  %s51 = sld [smem:[#allocation3]]
  %v52 = vstv %s51
  %v53 = vmul.u32 %v50, %v52
  %v54 = vshra.s32 %v47, 3
  %v55 = vand.u32 %v54, 7
  %vm56 = vcmp.eq.s32.totalorder %v55, 0
  %v57 = vsel %vm56, 1, 0
  %s58 = sld [smem:[#allocation3 + $0x1]]
  %v59 = vstv %s58
  %v60 = vmul.u32 %v57, %v59
  %v61 = vadd.s32 %v53, %v60
  %v62 = vshra.s32 %v47, 6
  %v63 = vand.u32 %v62, 7
  %vm64 = vcmp.eq.s32.totalorder %v63, 0
  %v65 = vsel %vm64, 1, 0
  %s66 = sld [smem:[#allocation3 + $0x2]]
  %v67 = vstv %s66
  %v68 = vmul.u32 %v65, %v67
  %v69 = vadd.s32 %v61, %v68
  %v70 = vstv %s20
  %v71 = vadd.s32 %v70, %v69
  %72 = vst [vmem:[%s3] sm:$0x1] %v71
  // Predicated region
  $region10: #{multiple_choice_qa_forward.1} parent=0 // pred_check
    _
  $region11: #{multiple_choice_qa_forward.1} parent=0 // pred_check_branch
    %74 = sbr.rel (0) target = $region13
  $region12: #{multiple_choice_qa_forward.1} parent=0 // pred_region
    _
  $region13: #{multiple_choice_qa_forward.1} parent=0 // pred_fallthru
    _
  // Predicated region
  $region14: #{multiple_choice_qa_forward.1} parent=0 // pred_check
    _
  $region15: #{multiple_choice_qa_forward.1} parent=0 // pred_check_branch
    %76 = sbr.rel (0) target = $region17
  $region16: #{multiple_choice_qa_forward.1} parent=0 // pred_region
    _
  $region17: #{multiple_choice_qa_forward.1} parent=0 // pred_fallthru
    _

</llo_original>
